<compile_context>
chip_gen: v5e
topology: v5e:2x2
jax: 0.10.0
libtpu: 0.0.40
codegen_flags: <defaults>
</compile_context>

<pallas_src>
import functools

import jax
import jax.numpy as jnp
from jax.experimental import pallas as pl
from jax.experimental.pallas import tpu as pltpu

IN_CHANNELS = 512            # hard-coded in the module's __init__
BASE_CHANNEL = 64            # cfg.MODEL.GFH.INTERNAL_CHANNEL (synthetic value)
POINTS_PER_LANE = 8          # cfg.INPUT.ANNOTATION.POINTS_PER_LANE
NUM_CLASSES = 2              # cfg.INPUT.ANNOTATION.NUM_CLASS
LANE_UP_PTS = POINTS_PER_LANE            # 8
LANE_DOWN_PTS = POINTS_PER_LANE + 1      # 9
OUT_TOTAL = LANE_DOWN_PTS + LANE_UP_PTS + NUM_CLASSES   # 19, ordered down | up | cls
OUT_PAD = 32                 # padded output rows (sublane-friendly, lane-dense stores)
FUSED_BASE = 3 * BASE_CHANNEL            # 192 fused hidden channels
BN_EPS = 1e-5
LANE = 128
DEFAULT_TILE_HW = 4096       # pixels per grid step (amortizes ~0.35 us/step overhead)
VMEM_TILE_BUDGET = 44 * 1024 * 1024      # conservative vs v7x 64 MiB physical per TC


# ---------------------------------------------------------------------------
# Kernel: one grid step = one batch element x one tile of pixels, all branches.
# ---------------------------------------------------------------------------
def ld_head_kernel(x_ref, w1_ref, shift_ref, w2_ref, b2_ref, out_ref):
    # x_ref: [1, 512, t_hw] f32 or bf16 (channels on sublanes, pixels on lanes).
    # Cast to bf16 here (no-op for bf16 inputs); the kernel is HBM-bound, so the
    # VPU cast is hidden under the DMA and we avoid a separate wrapper cast pass.
    x = x_ref[0].astype(jnp.bfloat16)

    # Fused first layer for all 3 branches (BN scale pre-folded into w1).
    h = jnp.dot(w1_ref[...], x, preferred_element_type=jnp.float32)   # [192, thw] f32
    # BN shift + ReLU in f32 (v5e VPU has no bf16).
    h = jnp.maximum(h + shift_ref[...], 0.0)

    # Fused block-diagonal second layer + bias; rows: down(9) | up(8) | cls(2) | pad.
    y = jnp.dot(w2_ref[...], h.astype(jnp.bfloat16),
                preferred_element_type=jnp.float32)                   # [32, thw] f32
    out_ref[0] = (y + b2_ref[...]).astype(out_ref.dtype)              # bf16 writeback


def _const_spec(shape):
    # Whole (tiny) operand resident in VMEM; constant index_map across the grid.
    return pl.BlockSpec(shape, lambda n, j: (0,) * len(shape))


# ---------------------------------------------------------------------------
# Tiling helpers.
# ---------------------------------------------------------------------------
def _vmem_bytes(t_hw, x_itemsize):
    """Rough working-set estimate for one grid step (double-buffered I/O)."""
    x_bufs = 2 * IN_CHANNELS * t_hw * x_itemsize           # pipelined x tiles
    out_bufs = 2 * OUT_PAD * t_hw * 2                       # bf16 output tiles
    weights = 2 * ((FUSED_BASE * IN_CHANNELS + OUT_PAD * FUSED_BASE) * 2
                   + (FUSED_BASE + OUT_PAD) * 4)
    interm = (IN_CHANNELS * t_hw * 2                        # in-kernel bf16 copy of x
              + FUSED_BASE * t_hw * (4 + 2)                 # h f32 + h bf16
              + OUT_PAD * t_hw * 4)                         # y f32
    return x_bufs + out_bufs + weights + interm


def _choose_tile(tile_hw, hw, n_batch, x_itemsize):
    t = min(int(tile_hw), hw)
    if t < hw:
        # Blocks smaller than the array must be 128-lane aligned.
        t = max(LANE, (t // LANE) * LANE)
    # Shrink until the working set fits a conservative VMEM budget (v7x cap).
    while _vmem_bytes(t, x_itemsize) > VMEM_TILE_BUDGET and t > LANE:
        t = max(LANE, ((t // 2) // LANE) * LANE)
    # Make sure the (batch, tile) grid has >= 2 steps whenever the pixel axis can
    # be split, so both v7x TensorCores get work on small batches.
    if n_batch * pl.cdiv(hw, t) < 2 and hw > LANE:
        t = max(LANE, ((pl.cdiv(hw, 2) + LANE - 1) // LANE) * LANE)
    return t


# ---------------------------------------------------------------------------
# Wrapper: layout plumbing + pallas_call.
# ---------------------------------------------------------------------------
def ld_head_forward(x_nchw, packed_params, *, tile_hw=DEFAULT_TILE_HW,
                    out_dtype=jnp.float32):
    """Returns dict(predict_cls, predict_loc) exactly like LDHeadModule.forward."""
    w1, shift, w2, b2 = packed_params
    N, C, H, W = x_nchw.shape
    assert C == IN_CHANNELS
    HW = H * W

    # NCHW -> [N, C, H*W] is a free reshape (no HBM transpose); pixels land on lanes.
    # No wrapper-side cast or pad: f32/bf16 is DMA'd as-is and cast in-kernel, and
    # Pallas partial edge blocks cover the pixel-axis remainder.
    x = x_nchw.reshape(N, C, HW)
    x_itemsize = jnp.dtype(x.dtype).itemsize

    t_hw = _choose_tile(tile_hw, HW, N, x_itemsize)
    grid = (N, pl.cdiv(HW, t_hw))

    vmem_limit = int(min(max(_vmem_bytes(t_hw, x_itemsize) + (12 << 20), 32 << 20),
                         56 << 20))

    flops = 2 * N * HW * (FUSED_BASE * IN_CHANNELS + OUT_PAD * FUSED_BASE)
    bytes_accessed = (N * HW * (IN_CHANNELS * x_itemsize + OUT_PAD * 2)
                      + (FUSED_BASE * IN_CHANNELS + OUT_PAD * FUSED_BASE) * 2
                      + (FUSED_BASE + OUT_PAD) * 4)
    cost = pl.CostEstimate(flops=int(flops), transcendentals=0,
                           bytes_accessed=int(bytes_accessed))

    out = pl.pallas_call(
        ld_head_kernel,
        out_shape=jax.ShapeDtypeStruct((N, OUT_PAD, HW), jnp.bfloat16),
        grid_spec=pltpu.PrefetchScalarGridSpec(
            num_scalar_prefetch=0,
            grid=grid,
            in_specs=[
                pl.BlockSpec((1, C, t_hw), lambda n, j: (n, 0, j)),
                _const_spec(w1.shape),      # [192, 512] bf16
                _const_spec(shift.shape),   # [192, 1]   f32
                _const_spec(w2.shape),      # [32, 192]  bf16 (block-diagonal)
                _const_spec(b2.shape),      # [32, 1]    f32
            ],
            out_specs=pl.BlockSpec((1, OUT_PAD, t_hw), lambda n, j: (n, 0, j)),
        ),
        compiler_params=pltpu.CompilerParams(
            dimension_semantics=("parallel", "parallel"),
            vmem_limit_bytes=vmem_limit),
        cost_estimate=cost,
    )(x, w1, shift, w2, b2)

    # Tiny epilogue in XLA, done in bf16: drop padded rows, move channels last,
    # split loc / cls, then cast to the requested output dtype (fuses in XLA).
    y = out[:, :OUT_TOTAL, :]                                # [N, 19, HW] bf16
    y = jnp.transpose(y, (0, 2, 1))                          # [N, HW, 19] bf16
    predict_loc = y[..., :LANE_DOWN_PTS + LANE_UP_PTS]       # down | up  (17)
    predict_cls = y[..., LANE_DOWN_PTS + LANE_UP_PTS:]       # cls        (2)
    predict_loc = predict_loc.reshape(N, -1, LANE_UP_PTS + LANE_DOWN_PTS)
    predict_cls = predict_cls.reshape(N, -1, NUM_CLASSES)
    return dict(predict_cls=predict_cls.astype(out_dtype),
                predict_loc=predict_loc.astype(out_dtype))


# ---------------------------------------------------------------------------
# Parameter construction mirroring the module's __init__, plus kernel packing.
# ---------------------------------------------------------------------------
def init_raw_params(key):
    """Per-branch params (eval-mode BN) matching LDHeadModule's initialization."""
    def kaiming_fan_out(k, out_c, in_c):
        # nn.init.kaiming_normal_(w, mode='fan_out', nonlinearity='relu'), 1x1 conv.
        std = (2.0 / out_c) ** 0.5
        return std * jax.random.normal(k, (out_c, in_c), dtype=jnp.float32)

    def conv_bias(k, fan_in, out_c):
        # torch default conv bias init: U(-1/sqrt(fan_in), 1/sqrt(fan_in)).
        bound = 1.0 / (fan_in ** 0.5)
        return jax.random.uniform(k, (out_c,), jnp.float32, -bound, bound)

    keys = jax.random.split(key, 6)
    branches = {}
    for i, (name, out_c) in enumerate(
            [("down", LANE_DOWN_PTS), ("up", LANE_UP_PTS), ("cls", NUM_CLASSES)]):
        k1, k2 = keys[2 * i], keys[2 * i + 1]
        branches[name] = dict(
            w1=kaiming_fan_out(k1, BASE_CHANNEL, IN_CHANNELS),      # [64, 512]
            gamma=jnp.ones((BASE_CHANNEL,), jnp.float32),
            beta=jnp.zeros((BASE_CHANNEL,), jnp.float32),
            mean=jnp.zeros((BASE_CHANNEL,), jnp.float32),
            var=jnp.ones((BASE_CHANNEL,), jnp.float32),
            w2=kaiming_fan_out(k2, out_c, BASE_CHANNEL),            # [out, 64]
            b2=conv_bias(jax.random.fold_in(k2, 1), BASE_CHANNEL, out_c),
        )
    return branches


def pack_params(raw):
    """Fold BN into conv1, fuse the 3 branches, build block-diagonal conv2."""
    # TODO(synk): training-mode BatchNorm (running-stat updates) is not implemented;
    # eval-mode BN is folded into the first conv.
    order = ("down", "up", "cls")
    out_dims = (LANE_DOWN_PTS, LANE_UP_PTS, NUM_CLASSES)

    w1_rows, shift_rows = [], []
    w2f = jnp.zeros((OUT_PAD, FUSED_BASE), jnp.float32)
    b2f = jnp.zeros((OUT_PAD,), jnp.float32)
    row = 0
    for bi, name in enumerate(order):
        p = raw[name]
        scale = p["gamma"] / jnp.sqrt(p["var"] + BN_EPS)            # [64]
        shift = p["beta"] - p["mean"] * scale                       # [64]
        w1_rows.append(p["w1"] * scale[:, None])                    # BN scale folded in
        shift_rows.append(shift)
        oc = out_dims[bi]
        col = bi * BASE_CHANNEL
        w2f = w2f.at[row:row + oc, col:col + BASE_CHANNEL].set(p["w2"])
        b2f = b2f.at[row:row + oc].set(p["b2"])
        row += oc

    w1f = jnp.concatenate(w1_rows, axis=0)                          # [192, 512]
    shiftf = jnp.concatenate(shift_rows, axis=0)                    # [192]
    return (w1f.astype(jnp.bfloat16),
            shiftf.reshape(-1, 1).astype(jnp.float32),              # [192, 1]
            w2f.astype(jnp.bfloat16),                               # [32, 192]
            b2f.reshape(-1, 1).astype(jnp.float32))                 # [32, 1]


# ---------------------------------------------------------------------------
# References for correctness checks.
# ---------------------------------------------------------------------------
def reference_f32(x_nchw, raw):
    """Pure-JAX f32 replica of the PyTorch module's forward."""
    N, C, H, W = x_nchw.shape
    x = jnp.transpose(x_nchw, (0, 2, 3, 1)).reshape(N, H * W, C)

    def branch(p):
        scale = p["gamma"] / jnp.sqrt(p["var"] + BN_EPS)
        h = x @ p["w1"].T
        h = h * scale + (p["beta"] - p["mean"] * scale)
        h = jnp.maximum(h, 0.0)
        return h @ p["w2"].T + p["b2"]

    down, up, cls = branch(raw["down"]), branch(raw["up"]), branch(raw["cls"])
    loc = jnp.concatenate([down, up], -1)
    return dict(predict_cls=cls.reshape(N, -1, NUM_CLASSES),
                predict_loc=loc.reshape(N, -1, LANE_UP_PTS + LANE_DOWN_PTS))


def reference_bf16(x_nchw, packed):
    """Same math as the kernel (bf16 operands + bf16 output, f32 acc) via plain XLA."""
    w1, shift, w2, b2 = packed
    N, C, H, W = x_nchw.shape
    x = x_nchw.reshape(N, C, H * W).astype(jnp.bfloat16).astype(jnp.float32)
    h = jnp.einsum("oc,nck->nok", w1.astype(jnp.float32), x)
    h = jnp.maximum(h + shift[None], 0.0)
    h = h.astype(jnp.bfloat16).astype(jnp.float32)
    y = jnp.einsum("oc,nck->nok", w2.astype(jnp.float32), h) + b2[None]
    y = y.astype(jnp.bfloat16).astype(jnp.float32)
    y = jnp.transpose(y[:, :OUT_TOTAL], (0, 2, 1))
    return dict(predict_cls=y[..., LANE_DOWN_PTS + LANE_UP_PTS:],
                predict_loc=y[..., :LANE_DOWN_PTS + LANE_UP_PTS])


def _check(out, x, raw, packed):
    ref_b = reference_bf16(x, packed)
    assert jnp.allclose(out["predict_loc"], ref_b["predict_loc"], atol=5e-2, rtol=5e-2)
    assert jnp.allclose(out["predict_cls"], ref_b["predict_cls"], atol=5e-2, rtol=5e-2)
    ref_f = reference_f32(x, raw)
    assert jnp.allclose(out["predict_loc"], ref_f["predict_loc"], atol=0.5, rtol=0.05)
    assert jnp.allclose(out["predict_cls"], ref_f["predict_cls"], atol=0.5, rtol=0.05)


# ---------------------------------------------------------------------------
if __name__ == "__main__":
    key = jax.random.PRNGKey(0)
    k_x, k_x2, k_p = jax.random.split(key, 3)

    raw = init_raw_params(k_p)
    packed = pack_params(raw)

    # Test A: small even spatial size (single full-size block per batch element).
    N, H, W = 2, 8, 8
    x = jax.random.normal(k_x, (N, IN_CHANNELS, H, W), dtype=jnp.float32)
    fwd = jax.jit(functools.partial(ld_head_forward, tile_hw=DEFAULT_TILE_HW))
    out = fwd(x, packed)
    jax.block_until_ready(out)
    assert out["predict_loc"].shape == (N, H * W, LANE_UP_PTS + LANE_DOWN_PTS)
    assert out["predict_cls"].shape == (N, H * W, NUM_CLASSES)
    _check(out, x, raw, packed)

    # Test B: pixel count not a multiple of the tile -> exercises the Pallas
    # partial edge block path (no wrapper-side padding of x).
    N2, H2, W2 = 1, 16, 10
    x2 = jax.random.normal(k_x2, (N2, IN_CHANNELS, H2, W2), dtype=jnp.float32)
    fwd_b = jax.jit(functools.partial(ld_head_forward, tile_hw=128))
    out2 = fwd_b(x2, packed)
    jax.block_until_ready(out2)
    assert out2["predict_loc"].shape == (N2, H2 * W2, LANE_UP_PTS + LANE_DOWN_PTS)
    assert out2["predict_cls"].shape == (N2, H2 * W2, NUM_CLASSES)
    _check(out2, x2, raw, packed)

    print("KERNEL_OK")
</pallas_src>

<mosaic_0001>
module attributes {stable_mosaic.version = 11 : i64} {
  func.func @ld_head_kernel(%arg0: i32, %arg1: i32, %arg2: memref<1x512x64xf32, #tpu.memory_space<vmem>>, %arg3: memref<192x512xbf16, #tpu.memory_space<vmem>>, %arg4: memref<192x1xf32, #tpu.memory_space<vmem>>, %arg5: memref<32x192xbf16, #tpu.memory_space<vmem>>, %arg6: memref<32x1xf32, #tpu.memory_space<vmem>>, %arg7: memref<1x32x64xbf16, #tpu.memory_space<vmem>>) attributes {dimension_semantics = [#tpu.dimension_semantics<parallel>, #tpu.dimension_semantics<parallel>], iteration_bounds = array<i64: 2, 1>, scalar_prefetch = 0 : i64, scratch_operands = 0 : i64, tpu.core_type = #tpu.core_type<tc>, window_params = [{transform_indices = @transform_0, window_bounds = array<i64: 1, 512, 64>}, {pipeline_mode = #tpu.pipeline_mode<synchronous>, transform_indices = @transform_1, window_bounds = array<i64: 192, 512>}, {pipeline_mode = #tpu.pipeline_mode<synchronous>, transform_indices = @transform_2, window_bounds = array<i64: 192, 1>}, {pipeline_mode = #tpu.pipeline_mode<synchronous>, transform_indices = @transform_3, window_bounds = array<i64: 32, 192>}, {pipeline_mode = #tpu.pipeline_mode<synchronous>, transform_indices = @transform_4, window_bounds = array<i64: 32, 1>}, {transform_indices = @transform_5, window_bounds = array<i64: 1, 32, 64>}]} {
    %c0 = arith.constant 0 : index
    %c0_0 = arith.constant 0 : index
    %c0_1 = arith.constant 0 : index
    %0 = vector.load %arg2[%c0, %c0_0, %c0_1] : memref<1x512x64xf32, #tpu.memory_space<vmem>>, vector<1x512x64xf32>
    %1 = vector.shape_cast %0 : vector<1x512x64xf32> to vector<512x64xf32>
    %2 = arith.truncf %1 : vector<512x64xf32> to vector<512x64xbf16>
    %c0_2 = arith.constant 0 : index
    %c0_3 = arith.constant 0 : index
    %3 = vector.load %arg3[%c0_2, %c0_3] : memref<192x512xbf16, #tpu.memory_space<vmem>>, vector<192x512xbf16>
    %cst = arith.constant dense<0.000000e+00> : vector<192x64xf32>
    %4 = tpu.matmul %3, %2, %cst {dimension_numbers = #tpu.dot_dimension_numbers<[1], [0], [0], [1], [0, 0, 1, 1], [], []>} : vector<192x512xbf16>, vector<512x64xbf16>, vector<192x64xf32> -> vector<192x64xf32>
    %c0_4 = arith.constant 0 : index
    %c0_5 = arith.constant 0 : index
    %5 = vector.load %arg4[%c0_4, %c0_5] : memref<192x1xf32, #tpu.memory_space<vmem>>, vector<192x1xf32>
    %6 = vector.broadcast %5 : vector<192x1xf32> to vector<192x64xf32>
    %7 = arith.addf %4, %6 : vector<192x64xf32>
    %cst_6 = arith.constant 0.000000e+00 : f32
    %8 = vector.broadcast %cst_6 : f32 to vector<192x64xf32>
    %9 = arith.maximumf %7, %8 : vector<192x64xf32>
    %c0_7 = arith.constant 0 : index
    %c0_8 = arith.constant 0 : index
    %10 = vector.load %arg5[%c0_7, %c0_8] : memref<32x192xbf16, #tpu.memory_space<vmem>>, vector<32x192xbf16>
    %11 = arith.truncf %9 : vector<192x64xf32> to vector<192x64xbf16>
    %cst_9 = arith.constant dense<0.000000e+00> : vector<32x64xf32>
    %12 = tpu.matmul %10, %11, %cst_9 {dimension_numbers = #tpu.dot_dimension_numbers<[1], [0], [0], [1], [0, 0, 1, 1], [], []>} : vector<32x192xbf16>, vector<192x64xbf16>, vector<32x64xf32> -> vector<32x64xf32>
    %c0_10 = arith.constant 0 : index
    %c0_11 = arith.constant 0 : index
    %13 = vector.load %arg6[%c0_10, %c0_11] : memref<32x1xf32, #tpu.memory_space<vmem>>, vector<32x1xf32>
    %14 = vector.broadcast %13 : vector<32x1xf32> to vector<32x64xf32>
    %15 = arith.addf %12, %14 : vector<32x64xf32>
    %16 = arith.truncf %15 : vector<32x64xf32> to vector<32x64xbf16>
    %c0_12 = arith.constant 0 : index
    %c0_13 = arith.constant 0 : index
    %c0_14 = arith.constant 0 : index
    %17 = vector.load %arg7[%c0_12, %c0_13, %c0_14] : memref<1x32x64xbf16, #tpu.memory_space<vmem>>, vector<1x32x64xbf16>
    %18 = vector.shape_cast %17 : vector<1x32x64xbf16> to vector<32x64xbf16>
    %19 = vector.shape_cast %16 : vector<32x64xbf16> to vector<1x32x64xbf16>
    tpu.vector_store %arg7[%c0_12, %c0_13, %c0_14], %19 {strides = array<i32>} : memref<1x32x64xbf16, #tpu.memory_space<vmem>>, vector<1x32x64xbf16>,
    return
  }
  func.func @transform_0(%arg0: i32, %arg1: i32) -> (i32, i32, i32) {
    %c0_i32 = arith.constant 0 : i32
    %c0_i32_0 = arith.constant 0 : i32
    return %arg0, %c0_i32, %arg1 : i32, i32, i32
  }
  func.func @transform_1(%arg0: i32, %arg1: i32) -> (i32, i32) {
    %c0_i32 = arith.constant 0 : i32
    %c0_i32_0 = arith.constant 0 : i32
    %c0_i32_1 = arith.constant 0 : i32
    return %c0_i32, %c0_i32_0 : i32, i32
  }
  func.func @transform_2(%arg0: i32, %arg1: i32) -> (i32, i32) {
    %c0_i32 = arith.constant 0 : i32
    %c0_i32_0 = arith.constant 0 : i32
    %c0_i32_1 = arith.constant 0 : i32
    return %c0_i32, %c0_i32_0 : i32, i32
  }
  func.func @transform_3(%arg0: i32, %arg1: i32) -> (i32, i32) {
    %c0_i32 = arith.constant 0 : i32
    %c0_i32_0 = arith.constant 0 : i32
    %c0_i32_1 = arith.constant 0 : i32
    return %c0_i32, %c0_i32_0 : i32, i32
  }
  func.func @transform_4(%arg0: i32, %arg1: i32) -> (i32, i32) {
    %c0_i32 = arith.constant 0 : i32
    %c0_i32_0 = arith.constant 0 : i32
    %c0_i32_1 = arith.constant 0 : i32
    return %c0_i32, %c0_i32_0 : i32, i32
  }
  func.func @transform_5(%arg0: i32, %arg1: i32) -> (i32, i32, i32) {
    %c0_i32 = arith.constant 0 : i32
    %c0_i32_0 = arith.constant 0 : i32
    return %arg0, %c0_i32, %arg1 : i32, i32, i32
  }
}

</mosaic_0001>

<llo_original>
// kernel: ld_head_forward.1
$region0: #{ld_head_forward.1}
  #allocation0 [shape = 'u32[]', space=smem, size = 0x4, offset = 0x4, fixed_abs, tag = 'smem constant byte address 0x4 - core index']
  #allocation1 [shape = 'u32[72,128]{1,0:T(1,128)}', space=vmem, size = 0x9000, scoped, tag = 'internal scratch']
  %s0 = inlined_call_operand.vmem [shape: f32[2,512,64], index: 0, kind: input, shape index: {}]
  %s1 = inlined_call_operand.vmem [shape: bf16[192,512], index: 1, kind: input, shape index: {}]
  %s2 = inlined_call_operand.vmem [shape: f32[192,1], index: 2, kind: input, shape index: {}]
  %s3 = inlined_call_operand.vmem [shape: bf16[32,192], index: 3, kind: input, shape index: {}]
  %s4 = inlined_call_operand.vmem [shape: f32[32,1], index: 4, kind: input, shape index: {}]
  %s5 = inlined_call_operand.vmem [shape: bf16[2,32,64], index: 5, kind: output, shape index: {}]
  %s6 = sld [smem:[#allocation0]]
  $region53: #{ld_head_forward.1} parent=0
    _
  %s8 = ssub.s32 1, %s6
  %s9 = scalar_select 0, %s8, %s6
  loop: start=0, step=1, limit=4
  $region2: #{ld_head_forward.1} parent=0 // loop_pre_header
    _
  $region3: #{ld_head_forward.1} parent=0 // loop_header
    %s11 = sphi 0, %s15
    %p12 = scmp.ge.s32.totalorder %s11, 4
    %s18 = sphi 0, %s30
    %s19 = sphi 0, %s26
    %s20 = sphi 0, %s18
    %s21 = sphi 0, %s19
    %s22 = sphi 0, %s20
    %s23 = sphi 0, %s21
    %s35 = sphi 0, %s37
    %s38 = sphi 0, %s35
    %s39 = sphi 0, %s38
    %s55 = sphi 0, %s39
    %s59 = sphi 0, %s59
    %s61 = sphi 0, %s59
    %s62 = sphi 0, %s61
    %s76 = sphi 0, %s62
    %s80 = sphi 0, %s80
    %s82 = sphi 0, %s80
    %s83 = sphi 0, %s82
    %s97 = sphi 0, %s83
    %s101 = sphi 0, %s101
    %s103 = sphi 0, %s101
    %s104 = sphi 0, %s103
    %s118 = sphi 0, %s104
    %s122 = sphi 0, %s122
    %s124 = sphi 0, %s122
    %s125 = sphi 0, %s124
    %s139 = sphi 0, %s125
    %s147 = sphi 0, %s149
    %s150 = sphi 0, %s147
    %s151 = sphi 0, %s150
    %s167 = sphi 0, %s151
  $region4: #{ld_head_forward.1} parent=0 // loop_header_branch
    %14 = sbr.rel (%p12) target = $region8
  $region5: #{ld_head_forward.1} parent=0 // loop_body
    %s16 = ssub.s32 %s11, 1
    %s17 = ssub.s32 %s11, 2
    %s24 = sadd.s32 1, %s19
    %p25 = scmp.ge.s32.totalorder %s24, 1
    %s26 = scalar_select %p25, 0, %s24
    %s27 = sadd.s32 1, %s18
    %s28 = scalar_select %p25, %s27, %s18
    %p29 = scmp.ge.s32.totalorder %s28, 2
    %s30 = scalar_select %p29, 0, %s28
    %s31 = ssub.s32 %s18, %s30
    %s32 = ssub.s32 %s19, %s26
    %s33 = sor.u32 %s31, %s32
    %p34 = scmp.eq.s32.totalorder %s33, 0
    %s36 = sadd.s32 %s35, 1
    %s37 = scalar_select %p34, %s35, %s36
    %p40 = pneg %p34
    %p41 = scmp.eq.s32.totalorder %s11, 1
    %p42 = por %p40, %p41
    %p43 = scmp.ne.s32.totalorder %s35, %s38
    %p44 = scmp.eq.s32.totalorder %s11, 0
    %p45 = por %p43, %p44
    %p46 = scmp.ne.s32.totalorder %s35, %s38
    %p47 = scmp.eq.s32.totalorder %s16, 1
    %p48 = por %p46, %p47
    %p49 = scmp.ne.s32.totalorder %s38, %s39
    %p50 = scmp.eq.s32.totalorder %s16, 0
    %p51 = por %p49, %p50
    %p52 = scmp.ne.s32.totalorder %s38, %s39
    %p53 = scmp.eq.s32.totalorder %s17, 1
    %p54 = por %p52, %p53
    %p56 = scmp.ne.s32.totalorder %s39, %s55
    %p57 = scmp.eq.s32.totalorder %s17, 0
    %p58 = por %p56, %p57
    %s60 = sadd.s32 %s59, 1
    %p63 = scmp.eq.s32.totalorder %s11, 1
    %p64 = scmp.ne.s32.totalorder %s59, %s61
    %p65 = scmp.eq.s32.totalorder %s11, 0
    %p66 = por %p64, %p65
    %p67 = scmp.ne.s32.totalorder %s59, %s61
    %p68 = scmp.eq.s32.totalorder %s16, 1
    %p69 = por %p67, %p68
    %p70 = scmp.ne.s32.totalorder %s61, %s62
    %p71 = scmp.eq.s32.totalorder %s16, 0
    %p72 = por %p70, %p71
    %p73 = scmp.ne.s32.totalorder %s61, %s62
    %p74 = scmp.eq.s32.totalorder %s17, 1
    %p75 = por %p73, %p74
    %p77 = scmp.ne.s32.totalorder %s62, %s76
    %p78 = scmp.eq.s32.totalorder %s17, 0
    %p79 = por %p77, %p78
    %s81 = sadd.s32 %s80, 1
    %p84 = scmp.eq.s32.totalorder %s11, 1
    %p85 = scmp.ne.s32.totalorder %s80, %s82
    %p86 = scmp.eq.s32.totalorder %s11, 0
    %p87 = por %p85, %p86
    %p88 = scmp.ne.s32.totalorder %s80, %s82
    %p89 = scmp.eq.s32.totalorder %s16, 1
    %p90 = por %p88, %p89
    %p91 = scmp.ne.s32.totalorder %s82, %s83
    %p92 = scmp.eq.s32.totalorder %s16, 0
    %p93 = por %p91, %p92
    %p94 = scmp.ne.s32.totalorder %s82, %s83
    %p95 = scmp.eq.s32.totalorder %s17, 1
    %p96 = por %p94, %p95
    %p98 = scmp.ne.s32.totalorder %s83, %s97
    %p99 = scmp.eq.s32.totalorder %s17, 0
    %p100 = por %p98, %p99
    %s102 = sadd.s32 %s101, 1
    %p105 = scmp.eq.s32.totalorder %s11, 1
    %p106 = scmp.ne.s32.totalorder %s101, %s103
    %p107 = scmp.eq.s32.totalorder %s11, 0
    %p108 = por %p106, %p107
    %p109 = scmp.ne.s32.totalorder %s101, %s103
    %p110 = scmp.eq.s32.totalorder %s16, 1
    %p111 = por %p109, %p110
    %p112 = scmp.ne.s32.totalorder %s103, %s104
    %p113 = scmp.eq.s32.totalorder %s16, 0
    %p114 = por %p112, %p113
    %p115 = scmp.ne.s32.totalorder %s103, %s104
    %p116 = scmp.eq.s32.totalorder %s17, 1
    %p117 = por %p115, %p116
    %p119 = scmp.ne.s32.totalorder %s104, %s118
    %p120 = scmp.eq.s32.totalorder %s17, 0
    %p121 = por %p119, %p120
    %s123 = sadd.s32 %s122, 1
    %p126 = scmp.eq.s32.totalorder %s11, 1
    %p127 = scmp.ne.s32.totalorder %s122, %s124
    %p128 = scmp.eq.s32.totalorder %s11, 0
    %p129 = por %p127, %p128
    %p130 = scmp.ne.s32.totalorder %s122, %s124
    %p131 = scmp.eq.s32.totalorder %s16, 1
    %p132 = por %p130, %p131
    %p133 = scmp.ne.s32.totalorder %s124, %s125
    %p134 = scmp.eq.s32.totalorder %s16, 0
    %p135 = por %p133, %p134
    %p136 = scmp.ne.s32.totalorder %s124, %s125
    %p137 = scmp.eq.s32.totalorder %s17, 1
    %p138 = por %p136, %p137
    %p140 = scmp.ne.s32.totalorder %s125, %s139
    %p141 = scmp.eq.s32.totalorder %s17, 0
    %p142 = por %p140, %p141
    %s143 = ssub.s32 %s18, %s30
    %s144 = ssub.s32 %s19, %s26
    %s145 = sor.u32 %s143, %s144
    %p146 = scmp.eq.s32.totalorder %s145, 0
    %s148 = sadd.s32 %s147, 1
    %s149 = scalar_select %p146, %s147, %s148
    %p152 = pneg %p146
    %p153 = scmp.eq.s32.totalorder %s11, 1
    %p154 = por %p152, %p153
    %p155 = scmp.ne.s32.totalorder %s147, %s150
    %p156 = scmp.eq.s32.totalorder %s11, 0
    %p157 = por %p155, %p156
    %p158 = scmp.ne.s32.totalorder %s147, %s150
    %p159 = scmp.eq.s32.totalorder %s16, 1
    %p160 = por %p158, %p159
    %p161 = scmp.ne.s32.totalorder %s150, %s151
    %p162 = scmp.eq.s32.totalorder %s16, 0
    %p163 = por %p161, %p162
    %p164 = scmp.ne.s32.totalorder %s150, %s151
    %p165 = scmp.eq.s32.totalorder %s17, 1
    %p166 = por %p164, %p165
    %p168 = scmp.ne.s32.totalorder %s151, %s167
    %p169 = scmp.eq.s32.totalorder %s17, 0
    %p170 = por %p168, %p169
    %p171 = scmp.le.s32.totalorder 1, %s11
    %p172 = scmp.lt.s32.totalorder %s11, 3
    %p173 = pnand %p171, %p172
    %p174 = pneg %p173
    // Predicated region
    $region9: #{ld_head_forward.1} parent=5 // pred_check
      _
    $region10: #{ld_head_forward.1} parent=5 // pred_check_branch
      %176 = sbr.rel (%p173) target = $region12
    $region11: #{ld_head_forward.1} parent=5 // pred_region
      %s177 = ssub.s32 %s11, 1
      // Predicated region
      $region13: #{ld_head_forward.1} parent=11 // pred_check
        %p178 = pneg %p72
      $region14: #{ld_head_forward.1} parent=11 // pred_check_branch
        %180 = sbr.rel (%p178) target = $region16
      $region15: #{ld_head_forward.1} parent=11 // pred_region
        _
      $region16: #{ld_head_forward.1} parent=11 // pred_fallthru
        _
      // Predicated region
      $region17: #{ld_head_forward.1} parent=11 // pred_check
        %p181 = pneg %p93
      $region18: #{ld_head_forward.1} parent=11 // pred_check_branch
        %183 = sbr.rel (%p181) target = $region20
      $region19: #{ld_head_forward.1} parent=11 // pred_region
        _
      $region20: #{ld_head_forward.1} parent=11 // pred_fallthru
        _
      // Predicated region
      $region21: #{ld_head_forward.1} parent=11 // pred_check
        %p184 = pneg %p114
      $region22: #{ld_head_forward.1} parent=11 // pred_check_branch
        %186 = sbr.rel (%p184) target = $region24
      $region23: #{ld_head_forward.1} parent=11 // pred_region
        _
      $region24: #{ld_head_forward.1} parent=11 // pred_fallthru
        _
      // Predicated region
      $region25: #{ld_head_forward.1} parent=11 // pred_check
        %p187 = pneg %p135
      $region26: #{ld_head_forward.1} parent=11 // pred_check_branch
        %189 = sbr.rel (%p187) target = $region28
      $region27: #{ld_head_forward.1} parent=11 // pred_region
        _
      $region28: #{ld_head_forward.1} parent=11 // pred_fallthru
        _
    $region12: #{ld_head_forward.1} parent=5 // pred_fallthru
      _
    %p190 = scmp.lt.s32.totalorder %s11, 2
    // Predicated region
    $region29: #{ld_head_forward.1} parent=5 // pred_check
      %p191 = pneg %p190
    $region30: #{ld_head_forward.1} parent=5 // pred_check_branch
      %193 = sbr.rel (%p191) target = $region32
    $region31: #{ld_head_forward.1} parent=5 // pred_region
      // Predicated region
      $region33: #{ld_head_forward.1} parent=31 // pred_check
        %p194 = pneg %p45
      $region34: #{ld_head_forward.1} parent=31 // pred_check_branch
        %196 = sbr.rel (%p194) target = $region36
      $region35: #{ld_head_forward.1} parent=31 // pred_region
        %p197 = scmp.lt.s32.totalorder %s18, 1
        %s198 = scalar_select %p197, %s18, 1
        %p199 = scmp.lt.s32.totalorder %s19, 0
        %s200 = scalar_select %p199, %s19, 0
        %s201 = smul.addr %s198, 64
        %s202 = sadd.s32 %s200, %s201
        %s203 = smul.addr %s202, 8
        %s204 = scalar_lea.vmem %s0, %s203
      $region36: #{ld_head_forward.1} parent=31 // pred_fallthru
        _
    $region32: #{ld_head_forward.1} parent=5 // pred_fallthru
      _
    %p205 = scmp.le.s32.totalorder 1, %s11
    %p206 = scmp.lt.s32.totalorder %s11, 3
    %p207 = pnand %p205, %p206
    %p208 = pneg %p207
    // Predicated region
    $region37: #{ld_head_forward.1} parent=5 // pred_check
      _
    $region38: #{ld_head_forward.1} parent=5 // pred_check_branch
      %210 = sbr.rel (%p207) target = $region40
    $region39: #{ld_head_forward.1} parent=5 // pred_region
      %s211 = ssub.s32 %s11, 1
      %p212 = scmp.lt.s32.totalorder %s20, 1
      %s213 = scalar_select %p212, %s20, 1
      %p214 = scmp.lt.s32.totalorder %s21, 0
      %s215 = scalar_select %p214, %s21, 0
      %s216 = smul.addr %s213, 64
      %s217 = sadd.s32 %s215, %s216
      %s218 = smul.addr %s217, 8
      %s219 = scalar_lea.vmem %s0, %s218
      %p220 = pneg %p51
      %p221 = pneg %p48
      %p222 = pneg %p72
      %p223 = pneg %p69
      %p224 = pneg %p93
      %p225 = pneg %p90
      %p226 = pneg %p114
      %p227 = pneg %p111
      %p228 = pneg %p135
      %p229 = pneg %p132
      %p230 = pneg %p163
      %p231 = pneg %p160
      %p232 = scmp.lt.s32.totalorder %s20, 1
      %s233 = scalar_select %p232, %s20, 1
      %p234 = scmp.lt.s32.totalorder %s21, 0
      %s235 = scalar_select %p234, %s21, 0
      %s236 = smul.addr %s233, 4
      %s237 = sadd.s32 %s235, %s236
      %s238 = smul.addr %s237, 4
      %s239 = scalar_lea.vmem %s5, %s238
      %p240 = scmp.lt.s32.totalorder %s20, 1
      %s241 = scalar_select %p240, %s20, 1
      %p242 = scmp.lt.s32.totalorder %s21, 0
      %s243 = scalar_select %p242, %s21, 0
      %s244 = smul.addr %s241, 64
      %s245 = sadd.s32 %s243, %s244
      %s246 = smul.addr %s245, 8
      %s247 = scalar_lea.vmem %s0, %s246
      %p248 = scmp.lt.s32.totalorder %s20, 1
      %s249 = scalar_select %p248, %s20, 1
      %p250 = scmp.lt.s32.totalorder %s21, 0
      %s251 = scalar_select %p250, %s21, 0
      %s252 = smul.addr %s249, 4
      %s253 = sadd.s32 %s251, %s252
      %s254 = smul.addr %s253, 4
      %s255 = scalar_lea.vmem %s5, %s254
      %v257 = vld [vmem:[%s247] sm:$0xff]
      %v258 = vld [vmem:[%s247 + $0x8] sm:$0xff]
      %v259 = vld [vmem:[%s247 + $0x10] sm:$0xff]
      %v260 = vld [vmem:[%s247 + $0x18] sm:$0xff]
      %v261 = vld [vmem:[%s247 + $0x20] sm:$0xff]
      %v262 = vld [vmem:[%s247 + $0x28] sm:$0xff]
      %v263 = vld [vmem:[%s247 + $0x30] sm:$0xff]
      %v264 = vld [vmem:[%s247 + $0x38] sm:$0xff]
      %v265 = vld [vmem:[%s247 + $0x40] sm:$0xff]
      %v266 = vld [vmem:[%s247 + $0x48] sm:$0xff]
      %v267 = vld [vmem:[%s247 + $0x50] sm:$0xff]
      %v268 = vld [vmem:[%s247 + $0x58] sm:$0xff]
      %v269 = vld [vmem:[%s247 + $0x60] sm:$0xff]
      %v270 = vld [vmem:[%s247 + $0x68] sm:$0xff]
      %v271 = vld [vmem:[%s247 + $0x70] sm:$0xff]
      %v272 = vld [vmem:[%s247 + $0x78] sm:$0xff]
      %v273 = vld [vmem:[%s247 + $0x80] sm:$0xff]
      %v274 = vld [vmem:[%s247 + $0x88] sm:$0xff]
      %v275 = vld [vmem:[%s247 + $0x90] sm:$0xff]
      %v276 = vld [vmem:[%s247 + $0x98] sm:$0xff]
      %v277 = vld [vmem:[%s247 + $0xa0] sm:$0xff]
      %v278 = vld [vmem:[%s247 + $0xa8] sm:$0xff]
      %v279 = vld [vmem:[%s247 + $0xb0] sm:$0xff]
      %v280 = vld [vmem:[%s247 + $0xb8] sm:$0xff]
      %v281 = vld [vmem:[%s247 + $0xc0] sm:$0xff]
      %v282 = vld [vmem:[%s247 + $0xc8] sm:$0xff]
      %v283 = vld [vmem:[%s247 + $0xd0] sm:$0xff]
      %v284 = vld [vmem:[%s247 + $0xd8] sm:$0xff]
      %v285 = vld [vmem:[%s247 + $0xe0] sm:$0xff]
      %v286 = vld [vmem:[%s247 + $0xe8] sm:$0xff]
      %v287 = vld [vmem:[%s247 + $0xf0] sm:$0xff]
      %v288 = vld [vmem:[%s247 + $0xf8] sm:$0xff]
      %v289 = vld [vmem:[%s247 + $0x100] sm:$0xff]
      %v290 = vld [vmem:[%s247 + $0x108] sm:$0xff]
      %v291 = vld [vmem:[%s247 + $0x110] sm:$0xff]
      %v292 = vld [vmem:[%s247 + $0x118] sm:$0xff]
      %v293 = vld [vmem:[%s247 + $0x120] sm:$0xff]
      %v294 = vld [vmem:[%s247 + $0x128] sm:$0xff]
      %v295 = vld [vmem:[%s247 + $0x130] sm:$0xff]
      %v296 = vld [vmem:[%s247 + $0x138] sm:$0xff]
      %v297 = vld [vmem:[%s247 + $0x140] sm:$0xff]
      %v298 = vld [vmem:[%s247 + $0x148] sm:$0xff]
      %v299 = vld [vmem:[%s247 + $0x150] sm:$0xff]
      %v300 = vld [vmem:[%s247 + $0x158] sm:$0xff]
      %v301 = vld [vmem:[%s247 + $0x160] sm:$0xff]
      %v302 = vld [vmem:[%s247 + $0x168] sm:$0xff]
      %v303 = vld [vmem:[%s247 + $0x170] sm:$0xff]
      %v304 = vld [vmem:[%s247 + $0x178] sm:$0xff]
      %v305 = vld [vmem:[%s247 + $0x180] sm:$0xff]
      %v306 = vld [vmem:[%s247 + $0x188] sm:$0xff]
      %v307 = vld [vmem:[%s247 + $0x190] sm:$0xff]
      %v308 = vld [vmem:[%s247 + $0x198] sm:$0xff]
      %v309 = vld [vmem:[%s247 + $0x1a0] sm:$0xff]
      %v310 = vld [vmem:[%s247 + $0x1a8] sm:$0xff]
      %v311 = vld [vmem:[%s247 + $0x1b0] sm:$0xff]
      %v312 = vld [vmem:[%s247 + $0x1b8] sm:$0xff]
      %v313 = vld [vmem:[%s247 + $0x1c0] sm:$0xff]
      %v314 = vld [vmem:[%s247 + $0x1c8] sm:$0xff]
      %v315 = vld [vmem:[%s247 + $0x1d0] sm:$0xff]
      %v316 = vld [vmem:[%s247 + $0x1d8] sm:$0xff]
      %v317 = vld [vmem:[%s247 + $0x1e0] sm:$0xff]
      %v318 = vld [vmem:[%s247 + $0x1e8] sm:$0xff]
      %v319 = vld [vmem:[%s247 + $0x1f0] sm:$0xff]
      %v320 = vld [vmem:[%s247 + $0x1f8] sm:$0xff]
      %v321 = vpack.c.bf16 %v258, %v257
      %v322 = vpack.c.bf16 %v260, %v259
      %v323 = vpack.c.bf16 %v262, %v261
      %v324 = vpack.c.bf16 %v264, %v263
      %v325 = vpack.c.bf16 %v266, %v265
      %v326 = vpack.c.bf16 %v268, %v267
      %v327 = vpack.c.bf16 %v270, %v269
      %v328 = vpack.c.bf16 %v272, %v271
      %v329 = vpack.c.bf16 %v274, %v273
      %v330 = vpack.c.bf16 %v276, %v275
      %v331 = vpack.c.bf16 %v278, %v277
      %v332 = vpack.c.bf16 %v280, %v279
      %v333 = vpack.c.bf16 %v282, %v281
      %v334 = vpack.c.bf16 %v284, %v283
      %v335 = vpack.c.bf16 %v286, %v285
      %v336 = vpack.c.bf16 %v288, %v287
      %v337 = vpack.c.bf16 %v290, %v289
      %v338 = vpack.c.bf16 %v292, %v291
      %v339 = vpack.c.bf16 %v294, %v293
      %v340 = vpack.c.bf16 %v296, %v295
      %v341 = vpack.c.bf16 %v298, %v297
      %v342 = vpack.c.bf16 %v300, %v299
      %v343 = vpack.c.bf16 %v302, %v301
      %v344 = vpack.c.bf16 %v304, %v303
      %v345 = vpack.c.bf16 %v306, %v305
      %v346 = vpack.c.bf16 %v308, %v307
      %v347 = vpack.c.bf16 %v310, %v309
      %v348 = vpack.c.bf16 %v312, %v311
      %v349 = vpack.c.bf16 %v314, %v313
      %v350 = vpack.c.bf16 %v316, %v315
      %v351 = vpack.c.bf16 %v318, %v317
      %v352 = vpack.c.bf16 %v320, %v319
      %v353 = vld [vmem:[%s1] sm:$0xff]
      %v354 = vld [vmem:[%s1 + $0x8] sm:$0xff]
      %v355 = vld [vmem:[%s1 + $0x10] sm:$0xff]
      %v356 = vld [vmem:[%s1 + $0x18] sm:$0xff]
      %v357 = vld [vmem:[%s1 + $0x20] sm:$0xff]
      %v358 = vld [vmem:[%s1 + $0x28] sm:$0xff]
      %v359 = vld [vmem:[%s1 + $0x30] sm:$0xff]
      %v360 = vld [vmem:[%s1 + $0x38] sm:$0xff]
      %v361 = vld [vmem:[%s1 + $0x40] sm:$0xff]
      %v362 = vld [vmem:[%s1 + $0x48] sm:$0xff]
      %v363 = vld [vmem:[%s1 + $0x50] sm:$0xff]
      %v364 = vld [vmem:[%s1 + $0x58] sm:$0xff]
      %v365 = vld [vmem:[%s1 + $0x60] sm:$0xff]
      %v366 = vld [vmem:[%s1 + $0x68] sm:$0xff]
      %v367 = vld [vmem:[%s1 + $0x70] sm:$0xff]
      %v368 = vld [vmem:[%s1 + $0x78] sm:$0xff]
      %v369 = vld [vmem:[%s1 + $0x80] sm:$0xff]
      %v370 = vld [vmem:[%s1 + $0x88] sm:$0xff]
      %v371 = vld [vmem:[%s1 + $0x90] sm:$0xff]
      %v372 = vld [vmem:[%s1 + $0x98] sm:$0xff]
      %v373 = vld [vmem:[%s1 + $0xa0] sm:$0xff]
      %v374 = vld [vmem:[%s1 + $0xa8] sm:$0xff]
      %v375 = vld [vmem:[%s1 + $0xb0] sm:$0xff]
      %v376 = vld [vmem:[%s1 + $0xb8] sm:$0xff]
      %v377 = vld [vmem:[%s1 + $0xc0] sm:$0xff]
      %v378 = vld [vmem:[%s1 + $0xc8] sm:$0xff]
      %v379 = vld [vmem:[%s1 + $0xd0] sm:$0xff]
      %v380 = vld [vmem:[%s1 + $0xd8] sm:$0xff]
      %v381 = vld [vmem:[%s1 + $0xe0] sm:$0xff]
      %v382 = vld [vmem:[%s1 + $0xe8] sm:$0xff]
      %v383 = vld [vmem:[%s1 + $0xf0] sm:$0xff]
      %v384 = vld [vmem:[%s1 + $0xf8] sm:$0xff]
      %v385 = vld [vmem:[%s1 + $0x100] sm:$0xff]
      %v386 = vld [vmem:[%s1 + $0x108] sm:$0xff]
      %v387 = vld [vmem:[%s1 + $0x110] sm:$0xff]
      %v388 = vld [vmem:[%s1 + $0x118] sm:$0xff]
      %v389 = vld [vmem:[%s1 + $0x120] sm:$0xff]
      %v390 = vld [vmem:[%s1 + $0x128] sm:$0xff]
      %v391 = vld [vmem:[%s1 + $0x130] sm:$0xff]
      %v392 = vld [vmem:[%s1 + $0x138] sm:$0xff]
      %v393 = vld [vmem:[%s1 + $0x140] sm:$0xff]
      %v394 = vld [vmem:[%s1 + $0x148] sm:$0xff]
      %v395 = vld [vmem:[%s1 + $0x150] sm:$0xff]
      %v396 = vld [vmem:[%s1 + $0x158] sm:$0xff]
      %v397 = vld [vmem:[%s1 + $0x160] sm:$0xff]
      %v398 = vld [vmem:[%s1 + $0x168] sm:$0xff]
      %v399 = vld [vmem:[%s1 + $0x170] sm:$0xff]
      %v400 = vld [vmem:[%s1 + $0x178] sm:$0xff]
      %v401 = vld [vmem:[%s2] sm:$0xff]
      %v402 = vld [vmem:[%s2 + $0x8] sm:$0xff]
      %v403 = vld [vmem:[%s2 + $0x10] sm:$0xff]
      %v404 = vld [vmem:[%s2 + $0x18] sm:$0xff]
      %v405 = vld [vmem:[%s2 + $0x20] sm:$0xff]
      %v406 = vld [vmem:[%s2 + $0x28] sm:$0xff]
      %v407 = vld [vmem:[%s2 + $0x30] sm:$0xff]
      %v408 = vld [vmem:[%s2 + $0x38] sm:$0xff]
      %v409 = vld [vmem:[%s2 + $0x40] sm:$0xff]
      %v410 = vld [vmem:[%s2 + $0x48] sm:$0xff]
      %v411 = vld [vmem:[%s2 + $0x50] sm:$0xff]
      %v412 = vld [vmem:[%s2 + $0x58] sm:$0xff]
      %v413 = vld [vmem:[%s2 + $0x60] sm:$0xff]
      %v414 = vld [vmem:[%s2 + $0x68] sm:$0xff]
      %v415 = vld [vmem:[%s2 + $0x70] sm:$0xff]
      %v416 = vld [vmem:[%s2 + $0x78] sm:$0xff]
      %v417 = vld [vmem:[%s2 + $0x80] sm:$0xff]
      %v418 = vld [vmem:[%s2 + $0x88] sm:$0xff]
      %v419 = vld [vmem:[%s2 + $0x90] sm:$0xff]
      %v420 = vld [vmem:[%s2 + $0x98] sm:$0xff]
      %v421 = vld [vmem:[%s2 + $0xa0] sm:$0xff]
      %v422 = vld [vmem:[%s2 + $0xa8] sm:$0xff]
      %v423 = vld [vmem:[%s2 + $0xb0] sm:$0xff]
      %v424 = vld [vmem:[%s2 + $0xb8] sm:$0xff]
      %426 = vset.pattern.permute.xlu0 0
      %427 = vperm.xlu0 %426, %v401
      %v428 = vpop.permute.xlu0 %427
      %431 = vset.pattern.permute.xlu0 0
      %432 = vperm.xlu0 %431, %v402
      %v433 = vpop.permute.xlu0 %432
      %436 = vset.pattern.permute.xlu0 0
      %437 = vperm.xlu0 %436, %v403
      %v438 = vpop.permute.xlu0 %437
      %441 = vset.pattern.permute.xlu0 0
      %442 = vperm.xlu0 %441, %v404
      %v443 = vpop.permute.xlu0 %442
      %446 = vset.pattern.permute.xlu0 0
      %447 = vperm.xlu0 %446, %v405
      %v448 = vpop.permute.xlu0 %447
      %451 = vset.pattern.permute.xlu0 0
      %452 = vperm.xlu0 %451, %v406
      %v453 = vpop.permute.xlu0 %452
      %456 = vset.pattern.permute.xlu0 0
      %457 = vperm.xlu0 %456, %v407
      %v458 = vpop.permute.xlu0 %457
      %461 = vset.pattern.permute.xlu0 0
      %462 = vperm.xlu0 %461, %v408
      %v463 = vpop.permute.xlu0 %462
      %466 = vset.pattern.permute.xlu0 0
      %467 = vperm.xlu0 %466, %v409
      %v468 = vpop.permute.xlu0 %467
      %471 = vset.pattern.permute.xlu0 0
      %472 = vperm.xlu0 %471, %v410
      %v473 = vpop.permute.xlu0 %472
      %476 = vset.pattern.permute.xlu0 0
      %477 = vperm.xlu0 %476, %v411
      %v478 = vpop.permute.xlu0 %477
      %481 = vset.pattern.permute.xlu0 0
      %482 = vperm.xlu0 %481, %v412
      %v483 = vpop.permute.xlu0 %482
      %486 = vset.pattern.permute.xlu0 0
      %487 = vperm.xlu0 %486, %v413
      %v488 = vpop.permute.xlu0 %487
      %491 = vset.pattern.permute.xlu0 0
      %492 = vperm.xlu0 %491, %v414
      %v493 = vpop.permute.xlu0 %492
      %496 = vset.pattern.permute.xlu0 0
      %497 = vperm.xlu0 %496, %v415
      %v498 = vpop.permute.xlu0 %497
      %501 = vset.pattern.permute.xlu0 0
      %502 = vperm.xlu0 %501, %v416
      %v503 = vpop.permute.xlu0 %502
      %506 = vset.pattern.permute.xlu0 0
      %507 = vperm.xlu0 %506, %v417
      %v508 = vpop.permute.xlu0 %507
      %511 = vset.pattern.permute.xlu0 0
      %512 = vperm.xlu0 %511, %v418
      %v513 = vpop.permute.xlu0 %512
      %516 = vset.pattern.permute.xlu0 0
      %517 = vperm.xlu0 %516, %v419
      %v518 = vpop.permute.xlu0 %517
      %521 = vset.pattern.permute.xlu0 0
      %522 = vperm.xlu0 %521, %v420
      %v523 = vpop.permute.xlu0 %522
      %526 = vset.pattern.permute.xlu0 0
      %527 = vperm.xlu0 %526, %v421
      %v528 = vpop.permute.xlu0 %527
      %531 = vset.pattern.permute.xlu0 0
      %532 = vperm.xlu0 %531, %v422
      %v533 = vpop.permute.xlu0 %532
      %536 = vset.pattern.permute.xlu0 0
      %537 = vperm.xlu0 %536, %v423
      %v538 = vpop.permute.xlu0 %537
      %541 = vset.pattern.permute.xlu0 0
      %542 = vperm.xlu0 %541, %v424
      %v543 = vpop.permute.xlu0 %542
      %v593 = vunpack.c.l.b16 %v353
      %v594 = vunpack.c.h.b16 %v353
      %v595 = vunpack.c.l.b16 %v354
      %v596 = vunpack.c.h.b16 %v354
      %v597 = vunpack.c.l.b16 %v355
      %v598 = vunpack.c.h.b16 %v355
      %v599 = vunpack.c.l.b16 %v356
      %v600 = vunpack.c.h.b16 %v356
      %v601 = vunpack.c.l.b16 %v357
      %v602 = vunpack.c.h.b16 %v357
      %v603 = vunpack.c.l.b16 %v358
      %v604 = vunpack.c.h.b16 %v358
      %v605 = vunpack.c.l.b16 %v359
      %v606 = vunpack.c.h.b16 %v359
      %v607 = vunpack.c.l.b16 %v360
      %v608 = vunpack.c.h.b16 %v360
      %v609 = vunpack.c.l.b16 %v361
      %v610 = vunpack.c.h.b16 %v361
      %v611 = vunpack.c.l.b16 %v362
      %v612 = vunpack.c.h.b16 %v362
      %v613 = vunpack.c.l.b16 %v363
      %v614 = vunpack.c.h.b16 %v363
      %v615 = vunpack.c.l.b16 %v364
      %v616 = vunpack.c.h.b16 %v364
      %v617 = vunpack.c.l.b16 %v365
      %v618 = vunpack.c.h.b16 %v365
      %v619 = vunpack.c.l.b16 %v366
      %v620 = vunpack.c.h.b16 %v366
      %v621 = vunpack.c.l.b16 %v367
      %v622 = vunpack.c.h.b16 %v367
      %v623 = vunpack.c.l.b16 %v368
      %v624 = vunpack.c.h.b16 %v368
      %v625 = vunpack.c.l.b16 %v369
      %v626 = vunpack.c.h.b16 %v369
      %v627 = vunpack.c.l.b16 %v370
      %v628 = vunpack.c.h.b16 %v370
      %v629 = vunpack.c.l.b16 %v371
      %v630 = vunpack.c.h.b16 %v371
      %v631 = vunpack.c.l.b16 %v372
      %v632 = vunpack.c.h.b16 %v372
      %v633 = vunpack.c.l.b16 %v373
      %v634 = vunpack.c.h.b16 %v373
      %v635 = vunpack.c.l.b16 %v374
      %v636 = vunpack.c.h.b16 %v374
      %v637 = vunpack.c.l.b16 %v375
      %v638 = vunpack.c.h.b16 %v375
      %v639 = vunpack.c.l.b16 %v376
      %v640 = vunpack.c.h.b16 %v376
      %v641 = vunpack.c.l.b16 %v377
      %v642 = vunpack.c.h.b16 %v377
      %v643 = vunpack.c.l.b16 %v378
      %v644 = vunpack.c.h.b16 %v378
      %v645 = vunpack.c.l.b16 %v379
      %v646 = vunpack.c.h.b16 %v379
      %v647 = vunpack.c.l.b16 %v380
      %v648 = vunpack.c.h.b16 %v380
      %v649 = vunpack.c.l.b16 %v381
      %v650 = vunpack.c.h.b16 %v381
      %v651 = vunpack.c.l.b16 %v382
      %v652 = vunpack.c.h.b16 %v382
      %v653 = vunpack.c.l.b16 %v383
      %v654 = vunpack.c.h.b16 %v383
      %v655 = vunpack.c.l.b16 %v384
      %v656 = vunpack.c.h.b16 %v384
      %v657 = vunpack.c.l.b16 %v385
      %v658 = vunpack.c.h.b16 %v385
      %v659 = vunpack.c.l.b16 %v386
      %v660 = vunpack.c.h.b16 %v386
      %v661 = vunpack.c.l.b16 %v387
      %v662 = vunpack.c.h.b16 %v387
      %v663 = vunpack.c.l.b16 %v388
      %v664 = vunpack.c.h.b16 %v388
      %v665 = vunpack.c.l.b16 %v389
      %v666 = vunpack.c.h.b16 %v389
      %v667 = vunpack.c.l.b16 %v390
      %v668 = vunpack.c.h.b16 %v390
      %v669 = vunpack.c.l.b16 %v391
      %v670 = vunpack.c.h.b16 %v391
      %v671 = vunpack.c.l.b16 %v392
      %v672 = vunpack.c.h.b16 %v392
      %v673 = vunpack.c.l.b16 %v393
      %v674 = vunpack.c.h.b16 %v393
      %v675 = vunpack.c.l.b16 %v394
      %v676 = vunpack.c.h.b16 %v394
      %v677 = vunpack.c.l.b16 %v395
      %v678 = vunpack.c.h.b16 %v395
      %v679 = vunpack.c.l.b16 %v396
      %v680 = vunpack.c.h.b16 %v396
      %v681 = vunpack.c.l.b16 %v397
      %v682 = vunpack.c.h.b16 %v397
      %v683 = vunpack.c.l.b16 %v398
      %v684 = vunpack.c.h.b16 %v398
      %v685 = vunpack.c.l.b16 %v399
      %v686 = vunpack.c.h.b16 %v399
      %v687 = vunpack.c.l.b16 %v400
      %v688 = vunpack.c.h.b16 %v400
      %v689 = vpack.c.b16 %v597, %v593
      %v690 = vpack.c.b16 %v598, %v594
      %v691 = vpack.c.b16 %v599, %v595
      %v692 = vpack.c.b16 %v600, %v596
      %v693 = vpack.c.b16 %v605, %v601
      %v694 = vpack.c.b16 %v606, %v602
      %v695 = vpack.c.b16 %v607, %v603
      %v696 = vpack.c.b16 %v608, %v604
      %v697 = vpack.c.b16 %v613, %v609
      %v698 = vpack.c.b16 %v614, %v610
      %v699 = vpack.c.b16 %v615, %v611
      %v700 = vpack.c.b16 %v616, %v612
      %v701 = vpack.c.b16 %v621, %v617
      %v702 = vpack.c.b16 %v622, %v618
      %v703 = vpack.c.b16 %v623, %v619
      %v704 = vpack.c.b16 %v624, %v620
      %v705 = vpack.c.b16 %v629, %v625
      %v706 = vpack.c.b16 %v630, %v626
      %v707 = vpack.c.b16 %v631, %v627
      %v708 = vpack.c.b16 %v632, %v628
      %v709 = vpack.c.b16 %v637, %v633
      %v710 = vpack.c.b16 %v638, %v634
      %v711 = vpack.c.b16 %v639, %v635
      %v712 = vpack.c.b16 %v640, %v636
      %v713 = vpack.c.b16 %v645, %v641
      %v714 = vpack.c.b16 %v646, %v642
      %v715 = vpack.c.b16 %v647, %v643
      %v716 = vpack.c.b16 %v648, %v644
      %v717 = vpack.c.b16 %v653, %v649
      %v718 = vpack.c.b16 %v654, %v650
      %v719 = vpack.c.b16 %v655, %v651
      %v720 = vpack.c.b16 %v656, %v652
      %v721 = vpack.c.b16 %v661, %v657
      %v722 = vpack.c.b16 %v662, %v658
      %v723 = vpack.c.b16 %v663, %v659
      %v724 = vpack.c.b16 %v664, %v660
      %v725 = vpack.c.b16 %v669, %v665
      %v726 = vpack.c.b16 %v670, %v666
      %v727 = vpack.c.b16 %v671, %v667
      %v728 = vpack.c.b16 %v672, %v668
      %v729 = vpack.c.b16 %v677, %v673
      %v730 = vpack.c.b16 %v678, %v674
      %v731 = vpack.c.b16 %v679, %v675
      %v732 = vpack.c.b16 %v680, %v676
      %v733 = vpack.c.b16 %v685, %v681
      %v734 = vpack.c.b16 %v686, %v682
      %v735 = vpack.c.b16 %v687, %v683
      %v736 = vpack.c.b16 %v688, %v684
      %785 = vmatpush.bf16.msra.mxu0 %v328
      %786 = vmatpush.bf16.msra.mxu0 %v327
      %787 = vmatpush.bf16.msra.mxu0 %v326
      %788 = vmatpush.bf16.msra.mxu0 %v325
      %789 = vmatpush.bf16.msra.mxu0 %v324
      %790 = vmatpush.bf16.msra.mxu0 %v323
      %791 = vmatpush.bf16.msra.mxu0 %v322
      %792 = vmatpush.bf16.msra.mxu0 %v321
      %793 = vmatmul.bf16.gmra.mxu0 %v689
      %v794 = vpop.f32.mrf.mxu0
      %v795 = vadd.f32 %v428, %v794
      %v796 = vpop.f32.mrf.mxu0
      %v797 = vadd.f32 %v433, %v796
      %798 = vmatmul.bf16.gmra.mxu0 %v693
      %v799 = vpop.f32.mrf.mxu0
      %v800 = vadd.f32 %v438, %v799
      %v801 = vpop.f32.mrf.mxu0
      %v802 = vadd.f32 %v443, %v801
      %803 = vmatmul.bf16.gmra.mxu0 %v697
      %v804 = vpop.f32.mrf.mxu0
      %v805 = vadd.f32 %v448, %v804
      %v806 = vpop.f32.mrf.mxu0
      %v807 = vadd.f32 %v453, %v806
      %808 = vmatmul.bf16.gmra.mxu0 %v701
      %v809 = vpop.f32.mrf.mxu0
      %v810 = vadd.f32 %v458, %v809
      %v811 = vpop.f32.mrf.mxu0
      %v812 = vadd.f32 %v463, %v811
      %813 = vmatmul.bf16.gmra.mxu0 %v705
      %v814 = vpop.f32.mrf.mxu0
      %v815 = vadd.f32 %v468, %v814
      %v816 = vpop.f32.mrf.mxu0
      %v817 = vadd.f32 %v473, %v816
      %818 = vmatmul.bf16.gmra.mxu0 %v709
      %v819 = vpop.f32.mrf.mxu0
      %v820 = vadd.f32 %v478, %v819
      %v821 = vpop.f32.mrf.mxu0
      %v822 = vadd.f32 %v483, %v821
      %823 = vmatmul.bf16.gmra.mxu0 %v713
      %v824 = vpop.f32.mrf.mxu0
      %v825 = vadd.f32 %v488, %v824
      %v826 = vpop.f32.mrf.mxu0
      %v827 = vadd.f32 %v493, %v826
      %828 = vmatmul.bf16.gmra.mxu0 %v717
      %v829 = vpop.f32.mrf.mxu0
      %v830 = vadd.f32 %v498, %v829
      %v831 = vpop.f32.mrf.mxu0
      %v832 = vadd.f32 %v503, %v831
      %833 = vmatmul.bf16.gmra.mxu0 %v721
      %v834 = vpop.f32.mrf.mxu0
      %v835 = vadd.f32 %v508, %v834
      %v836 = vpop.f32.mrf.mxu0
      %v837 = vadd.f32 %v513, %v836
      %838 = vmatmul.bf16.gmra.mxu0 %v725
      %v839 = vpop.f32.mrf.mxu0
      %v840 = vadd.f32 %v518, %v839
      %v841 = vpop.f32.mrf.mxu0
      %v842 = vadd.f32 %v523, %v841
      %843 = vmatmul.bf16.gmra.mxu0 %v729
      %v844 = vpop.f32.mrf.mxu0
      %v845 = vadd.f32 %v528, %v844
      %v846 = vpop.f32.mrf.mxu0
      %v847 = vadd.f32 %v533, %v846
      %848 = vmatmul.bf16.gmra.mxu0 %v733
      %v849 = vpop.f32.mrf.mxu0
      %v850 = vadd.f32 %v538, %v849
      %v851 = vpop.f32.mrf.mxu0
      %v852 = vadd.f32 %v543, %v851
      %853 = vdwg.mxu0
      %854 = vmatpush.bf16.msra.mxu0 %v336
      %855 = vmatpush.bf16.msra.mxu0 %v335
      %856 = vmatpush.bf16.msra.mxu0 %v334
      %857 = vmatpush.bf16.msra.mxu0 %v333
      %858 = vmatpush.bf16.msra.mxu0 %v332
      %859 = vmatpush.bf16.msra.mxu0 %v331
      %860 = vmatpush.bf16.msra.mxu0 %v330
      %861 = vmatpush.bf16.msra.mxu0 %v329
      %862 = vmatmul.bf16.gmra.mxu0 %v690
      %v863 = vpop.f32.mrf.mxu0
      %v864 = vadd.f32 %v795, %v863
      %v865 = vpop.f32.mrf.mxu0
      %v866 = vadd.f32 %v797, %v865
      %867 = vmatmul.bf16.gmra.mxu0 %v694
      %v868 = vpop.f32.mrf.mxu0
      %v869 = vadd.f32 %v800, %v868
      %v870 = vpop.f32.mrf.mxu0
      %v871 = vadd.f32 %v802, %v870
      %872 = vmatmul.bf16.gmra.mxu0 %v698
      %v873 = vpop.f32.mrf.mxu0
      %v874 = vadd.f32 %v805, %v873
      %v875 = vpop.f32.mrf.mxu0
      %v876 = vadd.f32 %v807, %v875
      %877 = vmatmul.bf16.gmra.mxu0 %v702
      %v878 = vpop.f32.mrf.mxu0
      %v879 = vadd.f32 %v810, %v878
      %v880 = vpop.f32.mrf.mxu0
      %v881 = vadd.f32 %v812, %v880
      %882 = vmatmul.bf16.gmra.mxu0 %v706
      %v883 = vpop.f32.mrf.mxu0
      %v884 = vadd.f32 %v815, %v883
      %v885 = vpop.f32.mrf.mxu0
      %v886 = vadd.f32 %v817, %v885
      %887 = vmatmul.bf16.gmra.mxu0 %v710
      %v888 = vpop.f32.mrf.mxu0
      %v889 = vadd.f32 %v820, %v888
      %v890 = vpop.f32.mrf.mxu0
      %v891 = vadd.f32 %v822, %v890
      %892 = vmatmul.bf16.gmra.mxu0 %v714
      %v893 = vpop.f32.mrf.mxu0
      %v894 = vadd.f32 %v825, %v893
      %v895 = vpop.f32.mrf.mxu0
      %v896 = vadd.f32 %v827, %v895
      %897 = vmatmul.bf16.gmra.mxu0 %v718
      %v898 = vpop.f32.mrf.mxu0
      %v899 = vadd.f32 %v830, %v898
      %v900 = vpop.f32.mrf.mxu0
      %v901 = vadd.f32 %v832, %v900
      %902 = vmatmul.bf16.gmra.mxu0 %v722
      %v903 = vpop.f32.mrf.mxu0
      %v904 = vadd.f32 %v835, %v903
      %v905 = vpop.f32.mrf.mxu0
      %v906 = vadd.f32 %v837, %v905
      %907 = vmatmul.bf16.gmra.mxu0 %v726
      %v908 = vpop.f32.mrf.mxu0
      %v909 = vadd.f32 %v840, %v908
      %v910 = vpop.f32.mrf.mxu0
      %v911 = vadd.f32 %v842, %v910
      %912 = vmatmul.bf16.gmra.mxu0 %v730
      %v913 = vpop.f32.mrf.mxu0
      %v914 = vadd.f32 %v845, %v913
      %v915 = vpop.f32.mrf.mxu0
      %v916 = vadd.f32 %v847, %v915
      %917 = vmatmul.bf16.gmra.mxu0 %v734
      %v918 = vpop.f32.mrf.mxu0
      %v919 = vadd.f32 %v850, %v918
      %v920 = vpop.f32.mrf.mxu0
      %v921 = vadd.f32 %v852, %v920
      %922 = vdwg.mxu0
      %923 = vmatpush.bf16.msra.mxu0 %v344
      %924 = vmatpush.bf16.msra.mxu0 %v343
      %925 = vmatpush.bf16.msra.mxu0 %v342
      %926 = vmatpush.bf16.msra.mxu0 %v341
      %927 = vmatpush.bf16.msra.mxu0 %v340
      %928 = vmatpush.bf16.msra.mxu0 %v339
      %929 = vmatpush.bf16.msra.mxu0 %v338
      %930 = vmatpush.bf16.msra.mxu0 %v337
      %931 = vmatmul.bf16.gmra.mxu0 %v691
      %v932 = vpop.f32.mrf.mxu0
      %v933 = vadd.f32 %v864, %v932
      %v934 = vpop.f32.mrf.mxu0
      %v935 = vadd.f32 %v866, %v934
      %936 = vmatmul.bf16.gmra.mxu0 %v695
      %v937 = vpop.f32.mrf.mxu0
      %v938 = vadd.f32 %v869, %v937
      %v939 = vpop.f32.mrf.mxu0
      %v940 = vadd.f32 %v871, %v939
      %941 = vmatmul.bf16.gmra.mxu0 %v699
      %v942 = vpop.f32.mrf.mxu0
      %v943 = vadd.f32 %v874, %v942
      %v944 = vpop.f32.mrf.mxu0
      %v945 = vadd.f32 %v876, %v944
      %946 = vmatmul.bf16.gmra.mxu0 %v703
      %v947 = vpop.f32.mrf.mxu0
      %v948 = vadd.f32 %v879, %v947
      %v949 = vpop.f32.mrf.mxu0
      %v950 = vadd.f32 %v881, %v949
      %951 = vmatmul.bf16.gmra.mxu0 %v707
      %v952 = vpop.f32.mrf.mxu0
      %v953 = vadd.f32 %v884, %v952
      %v954 = vpop.f32.mrf.mxu0
      %v955 = vadd.f32 %v886, %v954
      %956 = vmatmul.bf16.gmra.mxu0 %v711
      %v957 = vpop.f32.mrf.mxu0
      %v958 = vadd.f32 %v889, %v957
      %v959 = vpop.f32.mrf.mxu0
      %v960 = vadd.f32 %v891, %v959
      %961 = vmatmul.bf16.gmra.mxu0 %v715
      %v962 = vpop.f32.mrf.mxu0
      %v963 = vadd.f32 %v894, %v962
      %v964 = vpop.f32.mrf.mxu0
      %v965 = vadd.f32 %v896, %v964
      %966 = vmatmul.bf16.gmra.mxu0 %v719
      %v967 = vpop.f32.mrf.mxu0
      %v968 = vadd.f32 %v899, %v967
      %v969 = vpop.f32.mrf.mxu0
      %v970 = vadd.f32 %v901, %v969
      %971 = vmatmul.bf16.gmra.mxu0 %v723
      %v972 = vpop.f32.mrf.mxu0
      %v973 = vadd.f32 %v904, %v972
      %v974 = vpop.f32.mrf.mxu0
      %v975 = vadd.f32 %v906, %v974
      %976 = vmatmul.bf16.gmra.mxu0 %v727
      %v977 = vpop.f32.mrf.mxu0
      %v978 = vadd.f32 %v909, %v977
      %v979 = vpop.f32.mrf.mxu0
      %v980 = vadd.f32 %v911, %v979
      %981 = vmatmul.bf16.gmra.mxu0 %v731
      %v982 = vpop.f32.mrf.mxu0
      %v983 = vadd.f32 %v914, %v982
      %v984 = vpop.f32.mrf.mxu0
      %v985 = vadd.f32 %v916, %v984
      %986 = vmatmul.bf16.gmra.mxu0 %v735
      %v987 = vpop.f32.mrf.mxu0
      %v988 = vadd.f32 %v919, %v987
      %v989 = vpop.f32.mrf.mxu0
      %v990 = vadd.f32 %v921, %v989
      %991 = vdwg.mxu0
      %992 = vmatpush.bf16.msra.mxu0 %v352
      %993 = vmatpush.bf16.msra.mxu0 %v351
      %994 = vmatpush.bf16.msra.mxu0 %v350
      %995 = vmatpush.bf16.msra.mxu0 %v349
      %996 = vmatpush.bf16.msra.mxu0 %v348
      %997 = vmatpush.bf16.msra.mxu0 %v347
      %998 = vmatpush.bf16.msra.mxu0 %v346
      %999 = vmatpush.bf16.msra.mxu0 %v345
      %1000 = vmatmul.bf16.gmra.mxu0 %v692
      %v1001 = vpop.f32.mrf.mxu0
      %v1002 = vadd.f32 %v933, %v1001
      %v1003 = vpop.f32.mrf.mxu0
      %v1004 = vadd.f32 %v935, %v1003
      %1005 = vmatmul.bf16.gmra.mxu0 %v696
      %v1006 = vpop.f32.mrf.mxu0
      %v1007 = vadd.f32 %v938, %v1006
      %v1008 = vpop.f32.mrf.mxu0
      %v1009 = vadd.f32 %v940, %v1008
      %1010 = vmatmul.bf16.gmra.mxu0 %v700
      %v1011 = vpop.f32.mrf.mxu0
      %v1012 = vadd.f32 %v943, %v1011
      %v1013 = vpop.f32.mrf.mxu0
      %v1014 = vadd.f32 %v945, %v1013
      %1015 = vmatmul.bf16.gmra.mxu0 %v704
      %v1016 = vpop.f32.mrf.mxu0
      %v1017 = vadd.f32 %v948, %v1016
      %v1018 = vpop.f32.mrf.mxu0
      %v1019 = vadd.f32 %v950, %v1018
      %1020 = vmatmul.bf16.gmra.mxu0 %v708
      %v1021 = vpop.f32.mrf.mxu0
      %v1022 = vadd.f32 %v953, %v1021
      %v1023 = vpop.f32.mrf.mxu0
      %v1024 = vadd.f32 %v955, %v1023
      %1025 = vmatmul.bf16.gmra.mxu0 %v712
      %v1026 = vpop.f32.mrf.mxu0
      %v1027 = vadd.f32 %v958, %v1026
      %v1028 = vpop.f32.mrf.mxu0
      %v1029 = vadd.f32 %v960, %v1028
      %1030 = vmatmul.bf16.gmra.mxu0 %v716
      %v1031 = vpop.f32.mrf.mxu0
      %v1032 = vadd.f32 %v963, %v1031
      %v1033 = vpop.f32.mrf.mxu0
      %v1034 = vadd.f32 %v965, %v1033
      %1035 = vmatmul.bf16.gmra.mxu0 %v720
      %v1036 = vpop.f32.mrf.mxu0
      %v1037 = vadd.f32 %v968, %v1036
      %v1038 = vpop.f32.mrf.mxu0
      %v1039 = vadd.f32 %v970, %v1038
      %1040 = vmatmul.bf16.gmra.mxu0 %v724
      %v1041 = vpop.f32.mrf.mxu0
      %v1042 = vadd.f32 %v973, %v1041
      %v1043 = vpop.f32.mrf.mxu0
      %v1044 = vadd.f32 %v975, %v1043
      %1045 = vmatmul.bf16.gmra.mxu0 %v728
      %v1046 = vpop.f32.mrf.mxu0
      %v1047 = vadd.f32 %v978, %v1046
      %v1048 = vpop.f32.mrf.mxu0
      %v1049 = vadd.f32 %v980, %v1048
      %1050 = vmatmul.bf16.gmra.mxu0 %v732
      %v1051 = vpop.f32.mrf.mxu0
      %v1052 = vadd.f32 %v983, %v1051
      %v1053 = vpop.f32.mrf.mxu0
      %v1054 = vadd.f32 %v985, %v1053
      %1055 = vmatmul.bf16.gmra.mxu0 %v736
      %v1056 = vpop.f32.mrf.mxu0
      %v1057 = vadd.f32 %v988, %v1056
      %v1058 = vpop.f32.mrf.mxu0
      %v1059 = vadd.f32 %v990, %v1058
      %1060 = vdwg.mxu0
      %v1061 = vmax.f32 %v1002, 0.0
      %v1062 = vmax.f32 %v1004, 0.0
      %v1063 = vmax.f32 %v1007, 0.0
      %v1064 = vmax.f32 %v1009, 0.0
      %v1065 = vmax.f32 %v1012, 0.0
      %v1066 = vmax.f32 %v1014, 0.0
      %v1067 = vmax.f32 %v1017, 0.0
      %v1068 = vmax.f32 %v1019, 0.0
      %v1069 = vmax.f32 %v1022, 0.0
      %v1070 = vmax.f32 %v1024, 0.0
      %v1071 = vmax.f32 %v1027, 0.0
      %v1072 = vmax.f32 %v1029, 0.0
      %v1073 = vmax.f32 %v1032, 0.0
      %v1074 = vmax.f32 %v1034, 0.0
      %v1075 = vmax.f32 %v1037, 0.0
      %v1076 = vmax.f32 %v1039, 0.0
      %v1077 = vmax.f32 %v1042, 0.0
      %v1078 = vmax.f32 %v1044, 0.0
      %v1079 = vmax.f32 %v1047, 0.0
      %v1080 = vmax.f32 %v1049, 0.0
      %v1081 = vmax.f32 %v1052, 0.0
      %v1082 = vmax.f32 %v1054, 0.0
      %v1083 = vmax.f32 %v1057, 0.0
      %v1084 = vmax.f32 %v1059, 0.0
      %v1085 = vld [vmem:[%s3] sm:$0xff]
      %v1086 = vld [vmem:[%s3 + $0x8] sm:$0xff]
      %v1087 = vld [vmem:[%s3 + $0x10] sm:$0xff]
      %v1088 = vld [vmem:[%s3 + $0x18] sm:$0xff]
      %v1089 = vpack.c.bf16 %v1062, %v1061
      %v1090 = vpack.c.bf16 %v1064, %v1063
      %v1091 = vpack.c.bf16 %v1066, %v1065
      %v1092 = vpack.c.bf16 %v1068, %v1067
      %v1093 = vpack.c.bf16 %v1070, %v1069
      %v1094 = vpack.c.bf16 %v1072, %v1071
      %v1095 = vpack.c.bf16 %v1074, %v1073
      %v1096 = vpack.c.bf16 %v1076, %v1075
      %v1097 = vpack.c.bf16 %v1078, %v1077
      %v1098 = vpack.c.bf16 %v1080, %v1079
      %v1099 = vpack.c.bf16 %v1082, %v1081
      %v1100 = vpack.c.bf16 %v1084, %v1083
      %v1101 = vld [vmem:[%s4] sm:$0xff]
      %v1102 = vld [vmem:[%s4 + $0x8] sm:$0xff]
      %v1103 = vld [vmem:[%s4 + $0x10] sm:$0xff]
      %v1104 = vld [vmem:[%s4 + $0x18] sm:$0xff]
      %1106 = vset.pattern.permute.xlu0 0
      %1107 = vperm.xlu0 %1106, %v1101
      %v1108 = vpop.permute.xlu0 %1107
      %1111 = vset.pattern.permute.xlu0 0
      %1112 = vperm.xlu0 %1111, %v1102
      %v1113 = vpop.permute.xlu0 %1112
      %1116 = vset.pattern.permute.xlu0 0
      %1117 = vperm.xlu0 %1116, %v1103
      %v1118 = vpop.permute.xlu0 %1117
      %1121 = vset.pattern.permute.xlu0 0
      %1122 = vperm.xlu0 %1121, %v1104
      %v1123 = vpop.permute.xlu0 %1122
      %v1129 = vunpack.c.l.b16 %v1085
      %v1130 = vunpack.c.h.b16 %v1085
      %v1131 = vunpack.c.l.b16 %v1086
      %v1132 = vunpack.c.h.b16 %v1086
      %v1133 = vunpack.c.l.b16 %v1087
      %v1134 = vunpack.c.h.b16 %v1087
      %v1135 = vunpack.c.l.b16 %v1088
      %v1136 = vunpack.c.h.b16 %v1088
      %v1137 = vpack.c.b16 %v1131, %v1129
      %v1138 = vpack.c.b16 %v1132, %v1130
      %v1139 = vpack.c.b16 %v1135, %v1133
      %v1140 = vpack.c.b16 %v1136, %v1134
      %vm1143 = vcmask 523264
      %v1145 = vsel %vm1143, %v1138, 0
      %v1148 = vsel %vm1143, %v1140, 0
      %1150 = vmatpush.bf16.msra.mxu0 %v1096
      %1151 = vmatpush.bf16.msra.mxu0 %v1095
      %1152 = vmatpush.bf16.msra.mxu0 %v1094
      %1153 = vmatpush.bf16.msra.mxu0 %v1093
      %1154 = vmatpush.bf16.msra.mxu0 %v1092
      %1155 = vmatpush.bf16.msra.mxu0 %v1091
      %1156 = vmatpush.bf16.msra.mxu0 %v1090
      %1157 = vmatpush.bf16.msra.mxu0 %v1089
      %1158 = vmatmul.bf16.gmra.mxu0 %v1137
      %v1159 = vpop.f32.mrf.mxu0
      %v1160 = vadd.f32 %v1108, %v1159
      %v1161 = vpop.f32.mrf.mxu0
      %v1162 = vadd.f32 %v1113, %v1161
      %1163 = vmatmul.bf16.gmra.mxu0 %v1139
      %v1164 = vpop.f32.mrf.mxu0
      %v1165 = vadd.f32 %v1118, %v1164
      %v1166 = vpop.f32.mrf.mxu0
      %v1167 = vadd.f32 %v1123, %v1166
      %1168 = vdwg.mxu0
      %1169 = vmatpush.bf16.msra.mxu0 0
      %1170 = vmatpush.bf16.msra.mxu0 0
      %1171 = vmatpush.bf16.msra.mxu0 0
      %1172 = vmatpush.bf16.msra.mxu0 0
      %1173 = vmatpush.bf16.msra.mxu0 %v1100
      %1174 = vmatpush.bf16.msra.mxu0 %v1099
      %1175 = vmatpush.bf16.msra.mxu0 %v1098
      %1176 = vmatpush.bf16.msra.mxu0 %v1097
      %1177 = vmatmul.bf16.gmra.mxu0 %v1145
      %v1178 = vpop.f32.mrf.mxu0
      %v1179 = vadd.f32 %v1160, %v1178
      %v1180 = vpop.f32.mrf.mxu0
      %v1181 = vadd.f32 %v1162, %v1180
      %1182 = vmatmul.bf16.gmra.mxu0 %v1148
      %v1183 = vpop.f32.mrf.mxu0
      %v1184 = vadd.f32 %v1165, %v1183
      %v1185 = vpop.f32.mrf.mxu0
      %v1186 = vadd.f32 %v1167, %v1185
      %1187 = vdwg.mxu0
      %v1188 = vpack.c.bf16 %v1179, %v1179
      %v1189 = vpack.c.bf16 %v1181, %v1181
      %v1190 = vpack.c.bf16 %v1184, %v1184
      %v1191 = vpack.c.bf16 %v1186, %v1186
      %vm1192 = vcmask 519168
      %1193 = vst.msk [vmem:[%s255] sm:$0xf] %vm1192, %v1188
      %1194 = vst.msk [vmem:[%s255 + $0x4] sm:$0xf] %vm1192, %v1189
      %1195 = vst.msk [vmem:[%s255 + $0x8] sm:$0xf] %vm1192, %v1190
      %1196 = vst.msk [vmem:[%s255 + $0xc] sm:$0xf] %vm1192, %v1191
      %p1197 = scmp.lt.s32.totalorder %s20, 1
      %s1198 = scalar_select %p1197, %s20, 1
      %p1199 = scmp.lt.s32.totalorder %s21, 0
      %s1200 = scalar_select %p1199, %s21, 0
      %s1201 = smul.addr %s1198, 4
      %s1202 = sadd.s32 %s1200, %s1201
      %s1203 = smul.addr %s1202, 4
      %s1204 = scalar_lea.vmem %s5, %s1203
      // Predicated region
      $region41: #{ld_head_forward.1} parent=39 // pred_check
        %p1205 = pneg %p160
      $region42: #{ld_head_forward.1} parent=39 // pred_check_branch
        %1207 = sbr.rel (%p1205) target = $region44
      $region43: #{ld_head_forward.1} parent=39 // pred_region
        _
      $region44: #{ld_head_forward.1} parent=39 // pred_fallthru
        _
    $region40: #{ld_head_forward.1} parent=5 // pred_fallthru
      _
    %p1208 = scmp.le.s32.totalorder 2, %s11
    // Predicated region
    $region45: #{ld_head_forward.1} parent=5 // pred_check
      %p1209 = pneg %p1208
    $region46: #{ld_head_forward.1} parent=5 // pred_check_branch
      %1211 = sbr.rel (%p1209) target = $region48
    $region47: #{ld_head_forward.1} parent=5 // pred_region
      %s1212 = ssub.s32 %s11, 2
      // Predicated region
      $region49: #{ld_head_forward.1} parent=47 // pred_check
        %p1213 = pneg %p166
      $region50: #{ld_head_forward.1} parent=47 // pred_check_branch
        %1215 = sbr.rel (%p1213) target = $region52
      $region51: #{ld_head_forward.1} parent=47 // pred_region
        %p1216 = scmp.lt.s32.totalorder %s22, 1
        %s1217 = scalar_select %p1216, %s22, 1
        %p1218 = scmp.lt.s32.totalorder %s23, 0
        %s1219 = scalar_select %p1218, %s23, 0
        %s1220 = smul.addr %s1217, 4
        %s1221 = sadd.s32 %s1219, %s1220
        %s1222 = smul.addr %s1221, 4
        %s1223 = scalar_lea.vmem %s5, %s1222
      $region52: #{ld_head_forward.1} parent=47 // pred_fallthru
        _
    $region48: #{ld_head_forward.1} parent=5 // pred_fallthru
      _
  $region6: #{ld_head_forward.1} parent=0 // loop_footer
    %s15 = sadd.s32 1, %s11
  $region7: #{ld_head_forward.1} parent=0 // loop_footer_branch
    %10 = sbr.rel target = $region3
  $region8: #{ld_head_forward.1} parent=0 // loop_exit
    _

</llo_original>
